<compile_context>
chip_gen: v6e
topology: v6e:2x2x1
jax: 0.10.0
libtpu: 0.0.40
codegen_flags: <defaults>
</compile_context>

<pallas_src>
import functools

import numpy as np
import jax
import jax.numpy as jnp
from jax import lax
from jax.experimental import pallas as pl
from jax.experimental.pallas import tpu as pltpu

EPS = 1e-6
_MAX_TILE_R = 1024                 # upper bound on row tile
_TILE_BYTES = 4 * 1024 * 1024      # per (single) x input buffer in VMEM


def _pick_tile_r(R, hw, itemsize):
    """Row-tile size: as large as the VMEM budget allows, multiple of 8."""
    if R <= 8:
        return R                                   # full row dim (allowed)
    rows_by_vmem = max(8, (_TILE_BYTES // (hw * itemsize)) // 8 * 8)
    tile = min(_MAX_TILE_R, rows_by_vmem, R)
    if R >= 16:
        # keep at least 2 grid steps so both v7x TensorCores get work
        tile = min(tile, -(-R // 2))
    tile = max(8, (tile // 8) * 8)
    return tile


def _make_pool_matrix(hw, bin_num, b_pad):
    """Block-diagonal pooling matrix: P[k, off+j] = 1/group_b for k in group j of bin b."""
    P = np.zeros((hw, b_pad), np.float32)
    off = 0
    for b in bin_num:
        g = hw // b
        inv_g = 1.0 / g
        for j in range(b):
            P[j * g:(j + 1) * g, off + j] = inv_g
        off += b
    return jnp.asarray(P)


def _gemhpp_kernel(p_ref, x_ref, pool_ref, o_ref, *, eps):
    """One row-tile of fused GeM-HPP.

    p_ref    : SMEM (1,) float32          -- GeM exponent p
    x_ref    : VMEM (TILE_R, HW)          -- flattened spatial values (src dtype)
    pool_ref : VMEM (HW, B_pad) float32   -- block-diagonal pooling weights
    o_ref    : VMEM (TILE_R, B_pad)       -- pooled output (lane-dense)
    """
    p = p_ref[0]
    inv_p = 1.0 / p                               # hoisted scalar reciprocal

    x = x_ref[...].astype(jnp.float32)            # upcast in-kernel (not in HBM)
    x = jnp.maximum(x, eps)                       # clamp(min=eps)
    # x ** p with a traced exponent -> exp(p * log(x))  (EUP slot)
    xp = jnp.exp(p * jnp.log(x))

    # Grouped means for all bins at once on the MXU; 1/group folded into pool.
    m = jnp.dot(xp, pool_ref[...],
                preferred_element_type=jnp.float32,
                precision=lax.Precision.HIGHEST)

    # m ** (1/p); clamp keeps padded (all-zero) columns out of log(0).
    m = jnp.maximum(m, 1e-37)
    o_ref[...] = jnp.exp(jnp.log(m) * inv_p).astype(o_ref.dtype)


def gem_hpp(x, p_scalar, bin_num=(64,), eps=EPS):
    """x: [n, c, h, w] -> [n, c, sum(bin_num)]  (GeM horizontal pyramid pooling)."""
    n, c, h, w = x.shape
    hw = h * w
    for b in bin_num:
        assert hw % b == 0, "h*w must be divisible by each bin count"
    total = sum(bin_num)
    b_pad = -(-total // 128) * 128                # lane-dense output width

    R = n * c
    x_flat = x.reshape(R, hw)                     # keep source dtype in HBM
    pool = _make_pool_matrix(hw, bin_num, b_pad)

    tile_r = _pick_tile_r(R, hw, x_flat.dtype.itemsize)
    grid = (-(-R // tile_r),)

    kernel = functools.partial(_gemhpp_kernel, eps=eps)
    out = pl.pallas_call(
        kernel,
        out_shape=jax.ShapeDtypeStruct((R, b_pad), x.dtype),
        grid=grid,
        in_specs=[
            pl.BlockSpec(memory_space=pltpu.MemorySpace.SMEM),   # p (whole (1,) array)
            pl.BlockSpec((tile_r, hw), lambda i: (i, 0)),        # x row-tile
            pl.BlockSpec((hw, b_pad), lambda i: (0, 0)),         # pooling matrix (resident)
        ],
        out_specs=pl.BlockSpec((tile_r, b_pad), lambda i: (i, 0)),
        compiler_params=pltpu.CompilerParams(
            dimension_semantics=("parallel",),
            vmem_limit_bytes=48 * 1024 * 1024,    # explicit; safely < v7x 64 MiB physical
        ),
    )(jnp.asarray(p_scalar, jnp.float32), x_flat, pool)

    return out[:, :total].reshape(n, c, total)


def gem_hpp_reference(x, p_scalar, bin_num=(64,), eps=EPS):
    """Pure-JAX reference mirroring the PyTorch forward."""
    n, c, h, w = x.shape
    p = p_scalar[0].astype(jnp.float32)
    xf = x.astype(jnp.float32)
    feats = []
    for b in bin_num:
        z = xf.reshape(n, c, b, -1)
        z = jnp.maximum(z, eps) ** p
        z = jnp.mean(z, axis=-1) ** (1.0 / p)
        feats.append(z)
    return jnp.concatenate(feats, axis=-1).astype(x.dtype)


if __name__ == "__main__":
    key0, key1 = jax.random.split(jax.random.PRNGKey(0))
    # Deterministic parameter init, matching nn.Parameter(torch.ones(1) * 6.5)
    p_param = jnp.ones((1,), dtype=jnp.float32) * 6.5

    # --- Test 1: module defaults (bin_num=[64]) at small shapes -------------
    n, c, h, w = 2, 4, 16, 16                      # h*w = 256, divisible by 64
    bin_num = (64,)
    x = jax.random.uniform(key0, (n, c, h, w), dtype=jnp.float32)

    out = jax.block_until_ready(gem_hpp(x, p_param, bin_num))
    ref = gem_hpp_reference(x, p_param, bin_num)
    assert out.shape == (n, c, sum(bin_num)), out.shape
    assert jnp.allclose(out, ref, rtol=1e-3, atol=1e-5), (
        float(jnp.max(jnp.abs(out - ref))))

    # --- Test 2: multi-bin fusion + partial row tiles ------------------------
    n2, c2 = 3, 40                                 # R = 120 -> partial tail tile
    bins2 = (16, 8, 4, 2, 1)                       # fused into one pass
    x2 = jax.random.uniform(key1, (n2, c2, 16, 16), dtype=jnp.float32)

    out2 = jax.block_until_ready(gem_hpp(x2, p_param, bins2))
    ref2 = gem_hpp_reference(x2, p_param, bins2)
    assert out2.shape == (n2, c2, sum(bins2)), out2.shape
    assert jnp.allclose(out2, ref2, rtol=1e-3, atol=1e-5), (
        float(jnp.max(jnp.abs(out2 - ref2))))

    print("KERNEL_OK")
</pallas_src>

<mosaic_0001>
module attributes {stable_mosaic.version = 11 : i64} {
  func.func @_gemhpp_kernel(%arg0: i32, %arg1: memref<1xf32, #tpu.memory_space<smem>>, %arg2: memref<8x256xf32, #tpu.memory_space<vmem>>, %arg3: memref<256x128xf32, #tpu.memory_space<vmem>>, %arg4: memref<8x128xf32, #tpu.memory_space<vmem>>) attributes {dimension_semantics = [#tpu.dimension_semantics<parallel>], iteration_bounds = array<i64: 1>, scalar_prefetch = 0 : i64, scratch_operands = 0 : i64, tpu.core_type = #tpu.core_type<tc>, window_params = [{transform_indices = @transform_0, window_bounds = array<i64: 1>}, {transform_indices = @transform_1, window_bounds = array<i64: 8, 256>}, {pipeline_mode = #tpu.pipeline_mode<synchronous>, transform_indices = @transform_2, window_bounds = array<i64: 256, 128>}, {transform_indices = @transform_3, window_bounds = array<i64: 8, 128>}]} {
    %c0 = arith.constant 0 : index
    %0 = memref.load %arg1[%c0] : memref<1xf32, #tpu.memory_space<smem>>
    %cst = arith.constant 1.000000e+00 : f32
    %1 = arith.divf %cst, %0 : f32
    %c0_0 = arith.constant 0 : index
    %c0_1 = arith.constant 0 : index
    %2 = vector.load %arg2[%c0_0, %c0_1] : memref<8x256xf32, #tpu.memory_space<vmem>>, vector<8x256xf32>
    %cst_2 = arith.constant 9.99999997E-7 : f32
    %3 = vector.broadcast %cst_2 : f32 to vector<8x256xf32>
    %4 = arith.maximumf %2, %3 : vector<8x256xf32>
    %5 = math.log %4 : vector<8x256xf32>
    %6 = vector.broadcast %0 : f32 to vector<8x256xf32>
    %7 = arith.mulf %6, %5 : vector<8x256xf32>
    %8 = math.exp %7 : vector<8x256xf32>
    %c0_3 = arith.constant 0 : index
    %c0_4 = arith.constant 0 : index
    %9 = vector.load %arg3[%c0_3, %c0_4] : memref<256x128xf32, #tpu.memory_space<vmem>>, vector<256x128xf32>
    %cst_5 = arith.constant dense<0.000000e+00> : vector<8x128xf32>
    %10 = tpu.matmul %8, %9, %cst_5 {dimension_numbers = #tpu.dot_dimension_numbers<[1], [0], [0], [1], [0, 0, 1, 1], [], []>, precision = #tpu.contract_precision<fp32>} : vector<8x256xf32>, vector<256x128xf32>, vector<8x128xf32> -> vector<8x128xf32>
    %cst_6 = arith.constant 9.99999991E-38 : f32
    %11 = vector.broadcast %cst_6 : f32 to vector<8x128xf32>
    %12 = arith.maximumf %10, %11 : vector<8x128xf32>
    %13 = math.log %12 : vector<8x128xf32>
    %14 = vector.broadcast %1 : f32 to vector<8x128xf32>
    %15 = arith.mulf %13, %14 : vector<8x128xf32>
    %16 = math.exp %15 : vector<8x128xf32>
    %c0_7 = arith.constant 0 : index
    %c0_8 = arith.constant 0 : index
    %17 = vector.load %arg4[%c0_7, %c0_8] : memref<8x128xf32, #tpu.memory_space<vmem>>, vector<8x128xf32>
    tpu.vector_store %arg4[%c0_7, %c0_8], %16 {strides = array<i32>} : memref<8x128xf32, #tpu.memory_space<vmem>>, vector<8x128xf32>,
    return
  }
  func.func @transform_0(%arg0: i32) -> i32 {
    %c0_i32 = arith.constant 0 : i32
    %c0_i32_0 = arith.constant 0 : i32
    return %c0_i32 : i32
  }
  func.func @transform_1(%arg0: i32) -> (i32, i32) {
    %c0_i32 = arith.constant 0 : i32
    %c0_i32_0 = arith.constant 0 : i32
    return %arg0, %c0_i32 : i32, i32
  }
  func.func @transform_2(%arg0: i32) -> (i32, i32) {
    %c0_i32 = arith.constant 0 : i32
    %c0_i32_0 = arith.constant 0 : i32
    %c0_i32_1 = arith.constant 0 : i32
    return %c0_i32, %c0_i32_0 : i32, i32
  }
  func.func @transform_3(%arg0: i32) -> (i32, i32) {
    %c0_i32 = arith.constant 0 : i32
    %c0_i32_0 = arith.constant 0 : i32
    return %arg0, %c0_i32 : i32, i32
  }
}

</mosaic_0001>

<llo_original>
// kernel: tpu_custom_call.1
$region0: #{tpu_custom_call.1}
  #allocation0 [shape = 'u32[]', space=smem, size = 0x4, offset = 0x4, fixed_abs, tag = 'smem constant byte address 0x4 - core index']
  #allocation1 [shape = 'u32[144,128]{1,0:T(1,128)}', space=vmem, size = 0x12000, scoped, tag = 'internal scratch']
  #allocation2 [shape = 'f32[1]{0:T(128)S(6)}', space=smem, size = 0x200, scoped, tag = 'scoped memory for tpu_custom_call.1']
  %s0 = inlined_call_operand.<no memory space> [shape: f32[1], index: 0, kind: input, shape index: {}]
  %s1 = inlined_call_operand.hbm [shape: f32[8,256], index: 1, kind: input, shape index: {}]
  %s2 = inlined_call_operand.hbm [shape: f32[256,128], index: 2, kind: input, shape index: {}]
  %s3 = inlined_call_operand.hbm [shape: f32[8,128], index: 3, kind: output, shape index: {}]
  %s4 = sld [smem:[#allocation0]]
  $region30: #{tpu_custom_call.1} parent=0
    _
  %s6 = ssub.s32 1, %s4
  %s7 = scalar_select 0, %s6, %s4
  %8 = sst [smem:[#allocation2]] %s0
  $region1: #{tpu_custom_call.1} parent=0
    #allocation3 [shape = 'u8[8192]{0}', space=vmem, size = 0x2000, scoped, tag = 'input window, operand 1, single buffered']
    #allocation4 [shape = 's32[1]{0}', space=sflag, size = 0x4, scoped, tag = 'scoped memory for tpu_custom_call.1']
    #allocation5 [shape = 's32[1]{0}', space=sflag, size = 0x4, scoped, tag = 'scoped memory for tpu_custom_call.1']
    #allocation6 [shape = 'u8[131072]{0}', space=vmem, size = 0x20000, scoped, tag = 'input window, operand 2, single buffered']
    #allocation7 [shape = 's32[1]{0}', space=sflag, size = 0x4, scoped, tag = 'scoped memory for tpu_custom_call.1']
    #allocation8 [shape = 'u8[4096]{0}', space=vmem, size = 0x1000, scoped, tag = 'output window, operand 0, single buffered']
    %9 = vsyncpa [#allocation4], 0
    %10 = vsyncpa [#allocation7], 0
    %11 = vsyncpa [#allocation5], 0
    // Predicated region
    $region2: #{tpu_custom_call.1} parent=1 // pred_check
      _
    $region3: #{tpu_custom_call.1} parent=1 // pred_check_branch
      %13 = sbr.rel (0) target = $region5
    $region4: #{tpu_custom_call.1} parent=1 // pred_region
      _
    $region5: #{tpu_custom_call.1} parent=1 // pred_fallthru
      _
    // Predicated region
    $region6: #{tpu_custom_call.1} parent=1 // pred_check
      _
    $region7: #{tpu_custom_call.1} parent=1 // pred_check_branch
      %15 = sbr.rel (0) target = $region9
    $region8: #{tpu_custom_call.1} parent=1 // pred_region
      %s17 = ssub.s32 256, 256
      %18 = vsyncadd [#allocation4], %s17
      %s20 = sshll.u32 [#allocation3], 4
      %s21 = int_to_ptr.vmem [resolvable:$true] %s20
      %23 = dma.hbm_to_vmem [thread:$0]  %s1, 256, %s21, [#allocation4]
    $region9: #{tpu_custom_call.1} parent=1 // pred_fallthru
      _
    // Predicated region
    $region10: #{tpu_custom_call.1} parent=1 // pred_check
      _
    $region11: #{tpu_custom_call.1} parent=1 // pred_check_branch
      %25 = sbr.rel (0) target = $region13
    $region12: #{tpu_custom_call.1} parent=1 // pred_region
      %s27 = ssub.s32 4096, 4096
      %28 = vsyncadd [#allocation7], %s27
      %s29 = sshll.u32 [#allocation6], 4
      %s30 = int_to_ptr.vmem [resolvable:$true] %s29
      %35 = dma.hbm_to_vmem [thread:$0]  %s2, 4096, %s30, [#allocation7], 128, 128, 8
    $region13: #{tpu_custom_call.1} parent=1 // pred_fallthru
      _
    // Predicated region
    $region14: #{tpu_custom_call.1} parent=1 // pred_check
      _
    $region15: #{tpu_custom_call.1} parent=1 // pred_check_branch
      %37 = sbr.rel (0) target = $region17
    $region16: #{tpu_custom_call.1} parent=1 // pred_region
      %38 = dma.done [#allocation4], 256
    $region17: #{tpu_custom_call.1} parent=1 // pred_fallthru
      _
    // Predicated region
    $region18: #{tpu_custom_call.1} parent=1 // pred_check
      _
    $region19: #{tpu_custom_call.1} parent=1 // pred_check_branch
      %40 = sbr.rel (0) target = $region21
    $region20: #{tpu_custom_call.1} parent=1 // pred_region
      %41 = dma.done [#allocation7], 4096
    $region21: #{tpu_custom_call.1} parent=1 // pred_fallthru
      _
    %s42 = sld [smem:[#allocation2]]
    %v43 = vstv %s42
    %v44 = vrcp.pop %v43
    %s45 = vtos %v44
    %v46 = vld [vmem:[#allocation3] sm:$0xff]
    %v47 = vld [vmem:[#allocation3 + $0x8] sm:$0xff]
    %v48 = vmax.f32 %v46, 1e-06
    %v49 = vmax.f32 %v47, 1e-06
    %v50 = vlog2.pop %v48
    %v51 = vmul.f32 %v50, 0.6931472
    %v52 = vlog2.pop %v49
    %v53 = vmul.f32 %v52, 0.6931472
    %v54 = vstv %s42
    %v55 = vmul.f32 %v54, %v51
    %v56 = vmul.f32 %v54, %v53
    %v57 = vmul.f32 %v55, 1.442695
    %v58 = vpow.pop %v57
    %v59 = vmul.f32 %v56, 1.442695
    %v60 = vpow.pop %v59
    %v61 = vld [vmem:[#allocation6] sm:$0xff]
    %v62 = vld [vmem:[#allocation6 + $0x8] sm:$0xff]
    %v63 = vld [vmem:[#allocation6 + $0x10] sm:$0xff]
    %v64 = vld [vmem:[#allocation6 + $0x18] sm:$0xff]
    %v65 = vld [vmem:[#allocation6 + $0x20] sm:$0xff]
    %v66 = vld [vmem:[#allocation6 + $0x28] sm:$0xff]
    %v67 = vld [vmem:[#allocation6 + $0x30] sm:$0xff]
    %v68 = vld [vmem:[#allocation6 + $0x38] sm:$0xff]
    %v69 = vld [vmem:[#allocation6 + $0x40] sm:$0xff]
    %v70 = vld [vmem:[#allocation6 + $0x48] sm:$0xff]
    %v71 = vld [vmem:[#allocation6 + $0x50] sm:$0xff]
    %v72 = vld [vmem:[#allocation6 + $0x58] sm:$0xff]
    %v73 = vld [vmem:[#allocation6 + $0x60] sm:$0xff]
    %v74 = vld [vmem:[#allocation6 + $0x68] sm:$0xff]
    %v75 = vld [vmem:[#allocation6 + $0x70] sm:$0xff]
    %v76 = vld [vmem:[#allocation6 + $0x78] sm:$0xff]
    %v77 = vld [vmem:[#allocation6 + $0x80] sm:$0xff]
    %v78 = vld [vmem:[#allocation6 + $0x88] sm:$0xff]
    %v79 = vld [vmem:[#allocation6 + $0x90] sm:$0xff]
    %v80 = vld [vmem:[#allocation6 + $0x98] sm:$0xff]
    %v81 = vld [vmem:[#allocation6 + $0xa0] sm:$0xff]
    %v82 = vld [vmem:[#allocation6 + $0xa8] sm:$0xff]
    %v83 = vld [vmem:[#allocation6 + $0xb0] sm:$0xff]
    %v84 = vld [vmem:[#allocation6 + $0xb8] sm:$0xff]
    %v85 = vld [vmem:[#allocation6 + $0xc0] sm:$0xff]
    %v86 = vld [vmem:[#allocation6 + $0xc8] sm:$0xff]
    %v87 = vld [vmem:[#allocation6 + $0xd0] sm:$0xff]
    %v88 = vld [vmem:[#allocation6 + $0xd8] sm:$0xff]
    %v89 = vld [vmem:[#allocation6 + $0xe0] sm:$0xff]
    %v90 = vld [vmem:[#allocation6 + $0xe8] sm:$0xff]
    %v91 = vld [vmem:[#allocation6 + $0xf0] sm:$0xff]
    %v92 = vld [vmem:[#allocation6 + $0xf8] sm:$0xff]
    %93 = vmatprep.subr.mxu0 0.0
    %v94 = vand.u32 %v76, 4294901760
    %95 = vmatpush1.msra.mxu0 %v94
    %96 = vmatprep.subr.mxu0 0.0
    %v97 = vand.u32 %v75, 4294901760
    %98 = vmatpush1.msra.mxu0 %v97
    %99 = vmatprep.subr.mxu0 0.0
    %v100 = vand.u32 %v74, 4294901760
    %101 = vmatpush1.msra.mxu0 %v100
    %102 = vmatprep.subr.mxu0 0.0
    %v103 = vand.u32 %v73, 4294901760
    %104 = vmatpush1.msra.mxu0 %v103
    %105 = vmatprep.subr.mxu0 0.0
    %v106 = vand.u32 %v72, 4294901760
    %107 = vmatpush1.msra.mxu0 %v106
    %108 = vmatprep.subr.mxu0 0.0
    %v109 = vand.u32 %v71, 4294901760
    %110 = vmatpush1.msra.mxu0 %v109
    %111 = vmatprep.subr.mxu0 0.0
    %v112 = vand.u32 %v70, 4294901760
    %113 = vmatpush1.msra.mxu0 %v112
    %114 = vmatprep.subr.mxu0 0.0
    %v115 = vand.u32 %v69, 4294901760
    %116 = vmatpush1.msra.mxu0 %v115
    %117 = vmatprep.subr.mxu0 0.0
    %v118 = vand.u32 %v68, 4294901760
    %119 = vmatpush1.msra.mxu0 %v118
    %120 = vmatprep.subr.mxu0 0.0
    %v121 = vand.u32 %v67, 4294901760
    %122 = vmatpush1.msra.mxu0 %v121
    %123 = vmatprep.subr.mxu0 0.0
    %v124 = vand.u32 %v66, 4294901760
    %125 = vmatpush1.msra.mxu0 %v124
    %126 = vmatprep.subr.mxu0 0.0
    %v127 = vand.u32 %v65, 4294901760
    %128 = vmatpush1.msra.mxu0 %v127
    %129 = vmatprep.subr.mxu0 0.0
    %v130 = vand.u32 %v64, 4294901760
    %131 = vmatpush1.msra.mxu0 %v130
    %132 = vmatprep.subr.mxu0 0.0
    %v133 = vand.u32 %v63, 4294901760
    %134 = vmatpush1.msra.mxu0 %v133
    %135 = vmatprep.subr.mxu0 0.0
    %v136 = vand.u32 %v62, 4294901760
    %137 = vmatpush1.msra.mxu0 %v136
    %138 = vmatprep.subr.mxu0 0.0
    %v139 = vand.u32 %v61, 4294901760
    %140 = vmatpush1.msra.mxu0 %v139
    %141 = vmatprep.subr.mxu0 0.0
    %v142 = vand.u32 %v92, 4294901760
    %143 = vmatpush2.msra.mxu0 %v142
    %144 = vmatprep.subr.mxu0 0.0
    %v145 = vand.u32 %v91, 4294901760
    %146 = vmatpush2.msra.mxu0 %v145
    %147 = vmatprep.subr.mxu0 0.0
    %v148 = vand.u32 %v90, 4294901760
    %149 = vmatpush2.msra.mxu0 %v148
    %150 = vmatprep.subr.mxu0 0.0
    %v151 = vand.u32 %v89, 4294901760
    %152 = vmatpush2.msra.mxu0 %v151
    %153 = vmatprep.subr.mxu0 0.0
    %v154 = vand.u32 %v88, 4294901760
    %155 = vmatpush2.msra.mxu0 %v154
    %156 = vmatprep.subr.mxu0 0.0
    %v157 = vand.u32 %v87, 4294901760
    %158 = vmatpush2.msra.mxu0 %v157
    %159 = vmatprep.subr.mxu0 0.0
    %v160 = vand.u32 %v86, 4294901760
    %161 = vmatpush2.msra.mxu0 %v160
    %162 = vmatprep.subr.mxu0 0.0
    %v163 = vand.u32 %v85, 4294901760
    %164 = vmatpush2.msra.mxu0 %v163
    %165 = vmatprep.subr.mxu0 0.0
    %v166 = vand.u32 %v84, 4294901760
    %167 = vmatpush2.msra.mxu0 %v166
    %168 = vmatprep.subr.mxu0 0.0
    %v169 = vand.u32 %v83, 4294901760
    %170 = vmatpush2.msra.mxu0 %v169
    %171 = vmatprep.subr.mxu0 0.0
    %v172 = vand.u32 %v82, 4294901760
    %173 = vmatpush2.msra.mxu0 %v172
    %174 = vmatprep.subr.mxu0 0.0
    %v175 = vand.u32 %v81, 4294901760
    %176 = vmatpush2.msra.mxu0 %v175
    %177 = vmatprep.subr.mxu0 0.0
    %v178 = vand.u32 %v80, 4294901760
    %179 = vmatpush2.msra.mxu0 %v178
    %180 = vmatprep.subr.mxu0 0.0
    %v181 = vand.u32 %v79, 4294901760
    %182 = vmatpush2.msra.mxu0 %v181
    %183 = vmatprep.subr.mxu0 0.0
    %v184 = vand.u32 %v78, 4294901760
    %185 = vmatpush2.msra.mxu0 %v184
    %186 = vmatprep.subr.mxu0 0.0
    %v187 = vand.u32 %v77, 4294901760
    %188 = vmatpush2.msra.mxu0 %v187
    %v189 = vand.u32 %v60, 4294901760
    %v190 = vsub.f32 %v60, %v189
    %v191 = vand.u32 %v190, 4294901760
    %v192 = vsub.f32 %v190, %v191
    %v193 = vand.u32 %v192, 4294901760
    %194 = vmatprep.mubr.f32.mxu0 %v193
    %v195 = vand.u32 %v58, 4294901760
    %v196 = vsub.f32 %v58, %v195
    %v197 = vand.u32 %v196, 4294901760
    %v198 = vsub.f32 %v196, %v197
    %v199 = vand.u32 %v198, 4294901760
    %200 = vmatmul.mubr.f32.gmra.mxu0 %v199
    %v201 = vpop.f32.mrf.mxu0
    %v202 = vadd.f32 0.0, %v201
    %v203 = vpop.f32.mrf.mxu0
    %204 = vdwg.mxu0
    %205 = vmatprep.subr.mxu0 0.0
    %v206 = vand.u32 %v76, 4294901760
    %v207 = vsub.f32 %v76, %v206
    %v208 = vand.u32 %v207, 4294901760
    %v209 = vsub.f32 %v207, %v208
    %v210 = vand.u32 %v209, 4294901760
    %211 = vmatpush1.msra.mxu0 %v210
    %212 = vmatprep.subr.mxu0 0.0
    %v213 = vand.u32 %v75, 4294901760
    %v214 = vsub.f32 %v75, %v213
    %v215 = vand.u32 %v214, 4294901760
    %v216 = vsub.f32 %v214, %v215
    %v217 = vand.u32 %v216, 4294901760
    %218 = vmatpush1.msra.mxu0 %v217
    %219 = vmatprep.subr.mxu0 0.0
    %v220 = vand.u32 %v74, 4294901760
    %v221 = vsub.f32 %v74, %v220
    %v222 = vand.u32 %v221, 4294901760
    %v223 = vsub.f32 %v221, %v222
    %v224 = vand.u32 %v223, 4294901760
    %225 = vmatpush1.msra.mxu0 %v224
    %226 = vmatprep.subr.mxu0 0.0
    %v227 = vand.u32 %v73, 4294901760
    %v228 = vsub.f32 %v73, %v227
    %v229 = vand.u32 %v228, 4294901760
    %v230 = vsub.f32 %v228, %v229
    %v231 = vand.u32 %v230, 4294901760
    %232 = vmatpush1.msra.mxu0 %v231
    %233 = vmatprep.subr.mxu0 0.0
    %v234 = vand.u32 %v72, 4294901760
    %v235 = vsub.f32 %v72, %v234
    %v236 = vand.u32 %v235, 4294901760
    %v237 = vsub.f32 %v235, %v236
    %v238 = vand.u32 %v237, 4294901760
    %239 = vmatpush1.msra.mxu0 %v238
    %240 = vmatprep.subr.mxu0 0.0
    %v241 = vand.u32 %v71, 4294901760
    %v242 = vsub.f32 %v71, %v241
    %v243 = vand.u32 %v242, 4294901760
    %v244 = vsub.f32 %v242, %v243
    %v245 = vand.u32 %v244, 4294901760
    %246 = vmatpush1.msra.mxu0 %v245
    %247 = vmatprep.subr.mxu0 0.0
    %v248 = vand.u32 %v70, 4294901760
    %v249 = vsub.f32 %v70, %v248
    %v250 = vand.u32 %v249, 4294901760
    %v251 = vsub.f32 %v249, %v250
    %v252 = vand.u32 %v251, 4294901760
    %253 = vmatpush1.msra.mxu0 %v252
    %254 = vmatprep.subr.mxu0 0.0
    %v255 = vand.u32 %v69, 4294901760
    %v256 = vsub.f32 %v69, %v255
    %v257 = vand.u32 %v256, 4294901760
    %v258 = vsub.f32 %v256, %v257
    %v259 = vand.u32 %v258, 4294901760
    %260 = vmatpush1.msra.mxu0 %v259
    %261 = vmatprep.subr.mxu0 0.0
    %v262 = vand.u32 %v68, 4294901760
    %v263 = vsub.f32 %v68, %v262
    %v264 = vand.u32 %v263, 4294901760
    %v265 = vsub.f32 %v263, %v264
    %v266 = vand.u32 %v265, 4294901760
    %267 = vmatpush1.msra.mxu0 %v266
    %268 = vmatprep.subr.mxu0 0.0
    %v269 = vand.u32 %v67, 4294901760
    %v270 = vsub.f32 %v67, %v269
    %v271 = vand.u32 %v270, 4294901760
    %v272 = vsub.f32 %v270, %v271
    %v273 = vand.u32 %v272, 4294901760
    %274 = vmatpush1.msra.mxu0 %v273
    %275 = vmatprep.subr.mxu0 0.0
    %v276 = vand.u32 %v66, 4294901760
    %v277 = vsub.f32 %v66, %v276
    %v278 = vand.u32 %v277, 4294901760
    %v279 = vsub.f32 %v277, %v278
    %v280 = vand.u32 %v279, 4294901760
    %281 = vmatpush1.msra.mxu0 %v280
    %282 = vmatprep.subr.mxu0 0.0
    %v283 = vand.u32 %v65, 4294901760
    %v284 = vsub.f32 %v65, %v283
    %v285 = vand.u32 %v284, 4294901760
    %v286 = vsub.f32 %v284, %v285
    %v287 = vand.u32 %v286, 4294901760
    %288 = vmatpush1.msra.mxu0 %v287
    %289 = vmatprep.subr.mxu0 0.0
    %v290 = vand.u32 %v64, 4294901760
    %v291 = vsub.f32 %v64, %v290
    %v292 = vand.u32 %v291, 4294901760
    %v293 = vsub.f32 %v291, %v292
    %v294 = vand.u32 %v293, 4294901760
    %295 = vmatpush1.msra.mxu0 %v294
    %296 = vmatprep.subr.mxu0 0.0
    %v297 = vand.u32 %v63, 4294901760
    %v298 = vsub.f32 %v63, %v297
    %v299 = vand.u32 %v298, 4294901760
    %v300 = vsub.f32 %v298, %v299
    %v301 = vand.u32 %v300, 4294901760
    %302 = vmatpush1.msra.mxu0 %v301
    %303 = vmatprep.subr.mxu0 0.0
    %v304 = vand.u32 %v62, 4294901760
    %v305 = vsub.f32 %v62, %v304
    %v306 = vand.u32 %v305, 4294901760
    %v307 = vsub.f32 %v305, %v306
    %v308 = vand.u32 %v307, 4294901760
    %309 = vmatpush1.msra.mxu0 %v308
    %310 = vmatprep.subr.mxu0 0.0
    %v311 = vand.u32 %v61, 4294901760
    %v312 = vsub.f32 %v61, %v311
    %v313 = vand.u32 %v312, 4294901760
    %v314 = vsub.f32 %v312, %v313
    %v315 = vand.u32 %v314, 4294901760
    %316 = vmatpush1.msra.mxu0 %v315
    %317 = vmatprep.subr.mxu0 0.0
    %v318 = vand.u32 %v92, 4294901760
    %v319 = vsub.f32 %v92, %v318
    %v320 = vand.u32 %v319, 4294901760
    %v321 = vsub.f32 %v319, %v320
    %v322 = vand.u32 %v321, 4294901760
    %323 = vmatpush2.msra.mxu0 %v322
    %324 = vmatprep.subr.mxu0 0.0
    %v325 = vand.u32 %v91, 4294901760
    %v326 = vsub.f32 %v91, %v325
    %v327 = vand.u32 %v326, 4294901760
    %v328 = vsub.f32 %v326, %v327
    %v329 = vand.u32 %v328, 4294901760
    %330 = vmatpush2.msra.mxu0 %v329
    %331 = vmatprep.subr.mxu0 0.0
    %v332 = vand.u32 %v90, 4294901760
    %v333 = vsub.f32 %v90, %v332
    %v334 = vand.u32 %v333, 4294901760
    %v335 = vsub.f32 %v333, %v334
    %v336 = vand.u32 %v335, 4294901760
    %337 = vmatpush2.msra.mxu0 %v336
    %338 = vmatprep.subr.mxu0 0.0
    %v339 = vand.u32 %v89, 4294901760
    %v340 = vsub.f32 %v89, %v339
    %v341 = vand.u32 %v340, 4294901760
    %v342 = vsub.f32 %v340, %v341
    %v343 = vand.u32 %v342, 4294901760
    %344 = vmatpush2.msra.mxu0 %v343
    %345 = vmatprep.subr.mxu0 0.0
    %v346 = vand.u32 %v88, 4294901760
    %v347 = vsub.f32 %v88, %v346
    %v348 = vand.u32 %v347, 4294901760
    %v349 = vsub.f32 %v347, %v348
    %v350 = vand.u32 %v349, 4294901760
    %351 = vmatpush2.msra.mxu0 %v350
    %352 = vmatprep.subr.mxu0 0.0
    %v353 = vand.u32 %v87, 4294901760
    %v354 = vsub.f32 %v87, %v353
    %v355 = vand.u32 %v354, 4294901760
    %v356 = vsub.f32 %v354, %v355
    %v357 = vand.u32 %v356, 4294901760
    %358 = vmatpush2.msra.mxu0 %v357
    %359 = vmatprep.subr.mxu0 0.0
    %v360 = vand.u32 %v86, 4294901760
    %v361 = vsub.f32 %v86, %v360
    %v362 = vand.u32 %v361, 4294901760
    %v363 = vsub.f32 %v361, %v362
    %v364 = vand.u32 %v363, 4294901760
    %365 = vmatpush2.msra.mxu0 %v364
    %366 = vmatprep.subr.mxu0 0.0
    %v367 = vand.u32 %v85, 4294901760
    %v368 = vsub.f32 %v85, %v367
    %v369 = vand.u32 %v368, 4294901760
    %v370 = vsub.f32 %v368, %v369
    %v371 = vand.u32 %v370, 4294901760
    %372 = vmatpush2.msra.mxu0 %v371
    %373 = vmatprep.subr.mxu0 0.0
    %v374 = vand.u32 %v84, 4294901760
    %v375 = vsub.f32 %v84, %v374
    %v376 = vand.u32 %v375, 4294901760
    %v377 = vsub.f32 %v375, %v376
    %v378 = vand.u32 %v377, 4294901760
    %379 = vmatpush2.msra.mxu0 %v378
    %380 = vmatprep.subr.mxu0 0.0
    %v381 = vand.u32 %v83, 4294901760
    %v382 = vsub.f32 %v83, %v381
    %v383 = vand.u32 %v382, 4294901760
    %v384 = vsub.f32 %v382, %v383
    %v385 = vand.u32 %v384, 4294901760
    %386 = vmatpush2.msra.mxu0 %v385
    %387 = vmatprep.subr.mxu0 0.0
    %v388 = vand.u32 %v82, 4294901760
    %v389 = vsub.f32 %v82, %v388
    %v390 = vand.u32 %v389, 4294901760
    %v391 = vsub.f32 %v389, %v390
    %v392 = vand.u32 %v391, 4294901760
    %393 = vmatpush2.msra.mxu0 %v392
    %394 = vmatprep.subr.mxu0 0.0
    %v395 = vand.u32 %v81, 4294901760
    %v396 = vsub.f32 %v81, %v395
    %v397 = vand.u32 %v396, 4294901760
    %v398 = vsub.f32 %v396, %v397
    %v399 = vand.u32 %v398, 4294901760
    %400 = vmatpush2.msra.mxu0 %v399
    %401 = vmatprep.subr.mxu0 0.0
    %v402 = vand.u32 %v80, 4294901760
    %v403 = vsub.f32 %v80, %v402
    %v404 = vand.u32 %v403, 4294901760
    %v405 = vsub.f32 %v403, %v404
    %v406 = vand.u32 %v405, 4294901760
    %407 = vmatpush2.msra.mxu0 %v406
    %408 = vmatprep.subr.mxu0 0.0
    %v409 = vand.u32 %v79, 4294901760
    %v410 = vsub.f32 %v79, %v409
    %v411 = vand.u32 %v410, 4294901760
    %v412 = vsub.f32 %v410, %v411
    %v413 = vand.u32 %v412, 4294901760
    %414 = vmatpush2.msra.mxu0 %v413
    %415 = vmatprep.subr.mxu0 0.0
    %v416 = vand.u32 %v78, 4294901760
    %v417 = vsub.f32 %v78, %v416
    %v418 = vand.u32 %v417, 4294901760
    %v419 = vsub.f32 %v417, %v418
    %v420 = vand.u32 %v419, 4294901760
    %421 = vmatpush2.msra.mxu0 %v420
    %422 = vmatprep.subr.mxu0 0.0
    %v423 = vand.u32 %v77, 4294901760
    %v424 = vsub.f32 %v77, %v423
    %v425 = vand.u32 %v424, 4294901760
    %v426 = vsub.f32 %v424, %v425
    %v427 = vand.u32 %v426, 4294901760
    %428 = vmatpush2.msra.mxu0 %v427
    %v429 = vand.u32 %v60, 4294901760
    %430 = vmatprep.mubr.f32.mxu0 %v429
    %v431 = vand.u32 %v58, 4294901760
    %432 = vmatmul.mubr.f32.gmra.mxu0 %v431
    %v433 = vpop.f32.mrf.mxu0
    %v434 = vadd.f32 %v202, %v433
    %v435 = vpop.f32.mrf.mxu0
    %436 = vdwg.mxu0
    %437 = vmatprep.subr.mxu0 0.0
    %v438 = vand.u32 %v76, 4294901760
    %v439 = vsub.f32 %v76, %v438
    %440 = vmatpush1.msra.mxu0 %v439
    %441 = vmatprep.subr.mxu0 0.0
    %v442 = vand.u32 %v75, 4294901760
    %v443 = vsub.f32 %v75, %v442
    %444 = vmatpush1.msra.mxu0 %v443
    %445 = vmatprep.subr.mxu0 0.0
    %v446 = vand.u32 %v74, 4294901760
    %v447 = vsub.f32 %v74, %v446
    %448 = vmatpush1.msra.mxu0 %v447
    %449 = vmatprep.subr.mxu0 0.0
    %v450 = vand.u32 %v73, 4294901760
    %v451 = vsub.f32 %v73, %v450
    %452 = vmatpush1.msra.mxu0 %v451
    %453 = vmatprep.subr.mxu0 0.0
    %v454 = vand.u32 %v72, 4294901760
    %v455 = vsub.f32 %v72, %v454
    %456 = vmatpush1.msra.mxu0 %v455
    %457 = vmatprep.subr.mxu0 0.0
    %v458 = vand.u32 %v71, 4294901760
    %v459 = vsub.f32 %v71, %v458
    %460 = vmatpush1.msra.mxu0 %v459
    %461 = vmatprep.subr.mxu0 0.0
    %v462 = vand.u32 %v70, 4294901760
    %v463 = vsub.f32 %v70, %v462
    %464 = vmatpush1.msra.mxu0 %v463
    %465 = vmatprep.subr.mxu0 0.0
    %v466 = vand.u32 %v69, 4294901760
    %v467 = vsub.f32 %v69, %v466
    %468 = vmatpush1.msra.mxu0 %v467
    %469 = vmatprep.subr.mxu0 0.0
    %v470 = vand.u32 %v68, 4294901760
    %v471 = vsub.f32 %v68, %v470
    %472 = vmatpush1.msra.mxu0 %v471
    %473 = vmatprep.subr.mxu0 0.0
    %v474 = vand.u32 %v67, 4294901760
    %v475 = vsub.f32 %v67, %v474
    %476 = vmatpush1.msra.mxu0 %v475
    %477 = vmatprep.subr.mxu0 0.0
    %v478 = vand.u32 %v66, 4294901760
    %v479 = vsub.f32 %v66, %v478
    %480 = vmatpush1.msra.mxu0 %v479
    %481 = vmatprep.subr.mxu0 0.0
    %v482 = vand.u32 %v65, 4294901760
    %v483 = vsub.f32 %v65, %v482
    %484 = vmatpush1.msra.mxu0 %v483
    %485 = vmatprep.subr.mxu0 0.0
    %v486 = vand.u32 %v64, 4294901760
    %v487 = vsub.f32 %v64, %v486
    %488 = vmatpush1.msra.mxu0 %v487
    %489 = vmatprep.subr.mxu0 0.0
    %v490 = vand.u32 %v63, 4294901760
    %v491 = vsub.f32 %v63, %v490
    %492 = vmatpush1.msra.mxu0 %v491
    %493 = vmatprep.subr.mxu0 0.0
    %v494 = vand.u32 %v62, 4294901760
    %v495 = vsub.f32 %v62, %v494
    %496 = vmatpush1.msra.mxu0 %v495
    %497 = vmatprep.subr.mxu0 0.0
    %v498 = vand.u32 %v61, 4294901760
    %v499 = vsub.f32 %v61, %v498
    %500 = vmatpush1.msra.mxu0 %v499
    %501 = vmatprep.subr.mxu0 0.0
    %v502 = vand.u32 %v92, 4294901760
    %v503 = vsub.f32 %v92, %v502
    %504 = vmatpush2.msra.mxu0 %v503
    %505 = vmatprep.subr.mxu0 0.0
    %v506 = vand.u32 %v91, 4294901760
    %v507 = vsub.f32 %v91, %v506
    %508 = vmatpush2.msra.mxu0 %v507
    %509 = vmatprep.subr.mxu0 0.0
    %v510 = vand.u32 %v90, 4294901760
    %v511 = vsub.f32 %v90, %v510
    %512 = vmatpush2.msra.mxu0 %v511
    %513 = vmatprep.subr.mxu0 0.0
    %v514 = vand.u32 %v89, 4294901760
    %v515 = vsub.f32 %v89, %v514
    %516 = vmatpush2.msra.mxu0 %v515
    %517 = vmatprep.subr.mxu0 0.0
    %v518 = vand.u32 %v88, 4294901760
    %v519 = vsub.f32 %v88, %v518
    %520 = vmatpush2.msra.mxu0 %v519
    %521 = vmatprep.subr.mxu0 0.0
    %v522 = vand.u32 %v87, 4294901760
    %v523 = vsub.f32 %v87, %v522
    %524 = vmatpush2.msra.mxu0 %v523
    %525 = vmatprep.subr.mxu0 0.0
    %v526 = vand.u32 %v86, 4294901760
    %v527 = vsub.f32 %v86, %v526
    %528 = vmatpush2.msra.mxu0 %v527
    %529 = vmatprep.subr.mxu0 0.0
    %v530 = vand.u32 %v85, 4294901760
    %v531 = vsub.f32 %v85, %v530
    %532 = vmatpush2.msra.mxu0 %v531
    %533 = vmatprep.subr.mxu0 0.0
    %v534 = vand.u32 %v84, 4294901760
    %v535 = vsub.f32 %v84, %v534
    %536 = vmatpush2.msra.mxu0 %v535
    %537 = vmatprep.subr.mxu0 0.0
    %v538 = vand.u32 %v83, 4294901760
    %v539 = vsub.f32 %v83, %v538
    %540 = vmatpush2.msra.mxu0 %v539
    %541 = vmatprep.subr.mxu0 0.0
    %v542 = vand.u32 %v82, 4294901760
    %v543 = vsub.f32 %v82, %v542
    %544 = vmatpush2.msra.mxu0 %v543
    %545 = vmatprep.subr.mxu0 0.0
    %v546 = vand.u32 %v81, 4294901760
    %v547 = vsub.f32 %v81, %v546
    %548 = vmatpush2.msra.mxu0 %v547
    %549 = vmatprep.subr.mxu0 0.0
    %v550 = vand.u32 %v80, 4294901760
    %v551 = vsub.f32 %v80, %v550
    %552 = vmatpush2.msra.mxu0 %v551
    %553 = vmatprep.subr.mxu0 0.0
    %v554 = vand.u32 %v79, 4294901760
    %v555 = vsub.f32 %v79, %v554
    %556 = vmatpush2.msra.mxu0 %v555
    %557 = vmatprep.subr.mxu0 0.0
    %v558 = vand.u32 %v78, 4294901760
    %v559 = vsub.f32 %v78, %v558
    %560 = vmatpush2.msra.mxu0 %v559
    %561 = vmatprep.subr.mxu0 0.0
    %v562 = vand.u32 %v77, 4294901760
    %v563 = vsub.f32 %v77, %v562
    %564 = vmatpush2.msra.mxu0 %v563
    %v565 = vand.u32 %v60, 4294901760
    %v566 = vsub.f32 %v60, %v565
    %567 = vmatprep.mubr.f32.mxu0 %v566
    %v568 = vand.u32 %v58, 4294901760
    %v569 = vsub.f32 %v58, %v568
    %570 = vmatmul.mubr.f32.gmra.mxu0 %v569
    %v571 = vpop.f32.mrf.mxu0
    %v572 = vadd.f32 %v434, %v571
    %v573 = vpop.f32.mrf.mxu0
    %574 = vdwg.mxu0
    %575 = vmatprep.subr.mxu0 0.0
    %v576 = vand.u32 %v76, 4294901760
    %577 = vmatpush1.msra.mxu0 %v576
    %578 = vmatprep.subr.mxu0 0.0
    %v579 = vand.u32 %v75, 4294901760
    %580 = vmatpush1.msra.mxu0 %v579
    %581 = vmatprep.subr.mxu0 0.0
    %v582 = vand.u32 %v74, 4294901760
    %583 = vmatpush1.msra.mxu0 %v582
    %584 = vmatprep.subr.mxu0 0.0
    %v585 = vand.u32 %v73, 4294901760
    %586 = vmatpush1.msra.mxu0 %v585
    %587 = vmatprep.subr.mxu0 0.0
    %v588 = vand.u32 %v72, 4294901760
    %589 = vmatpush1.msra.mxu0 %v588
    %590 = vmatprep.subr.mxu0 0.0
    %v591 = vand.u32 %v71, 4294901760
    %592 = vmatpush1.msra.mxu0 %v591
    %593 = vmatprep.subr.mxu0 0.0
    %v594 = vand.u32 %v70, 4294901760
    %595 = vmatpush1.msra.mxu0 %v594
    %596 = vmatprep.subr.mxu0 0.0
    %v597 = vand.u32 %v69, 4294901760
    %598 = vmatpush1.msra.mxu0 %v597
    %599 = vmatprep.subr.mxu0 0.0
    %v600 = vand.u32 %v68, 4294901760
    %601 = vmatpush1.msra.mxu0 %v600
    %602 = vmatprep.subr.mxu0 0.0
    %v603 = vand.u32 %v67, 4294901760
    %604 = vmatpush1.msra.mxu0 %v603
    %605 = vmatprep.subr.mxu0 0.0
    %v606 = vand.u32 %v66, 4294901760
    %607 = vmatpush1.msra.mxu0 %v606
    %608 = vmatprep.subr.mxu0 0.0
    %v609 = vand.u32 %v65, 4294901760
    %610 = vmatpush1.msra.mxu0 %v609
    %611 = vmatprep.subr.mxu0 0.0
    %v612 = vand.u32 %v64, 4294901760
    %613 = vmatpush1.msra.mxu0 %v612
    %614 = vmatprep.subr.mxu0 0.0
    %v615 = vand.u32 %v63, 4294901760
    %616 = vmatpush1.msra.mxu0 %v615
    %617 = vmatprep.subr.mxu0 0.0
    %v618 = vand.u32 %v62, 4294901760
    %619 = vmatpush1.msra.mxu0 %v618
    %620 = vmatprep.subr.mxu0 0.0
    %v621 = vand.u32 %v61, 4294901760
    %622 = vmatpush1.msra.mxu0 %v621
    %623 = vmatprep.subr.mxu0 0.0
    %v624 = vand.u32 %v92, 4294901760
    %625 = vmatpush2.msra.mxu0 %v624
    %626 = vmatprep.subr.mxu0 0.0
    %v627 = vand.u32 %v91, 4294901760
    %628 = vmatpush2.msra.mxu0 %v627
    %629 = vmatprep.subr.mxu0 0.0
    %v630 = vand.u32 %v90, 4294901760
    %631 = vmatpush2.msra.mxu0 %v630
    %632 = vmatprep.subr.mxu0 0.0
    %v633 = vand.u32 %v89, 4294901760
    %634 = vmatpush2.msra.mxu0 %v633
    %635 = vmatprep.subr.mxu0 0.0
    %v636 = vand.u32 %v88, 4294901760
    %637 = vmatpush2.msra.mxu0 %v636
    %638 = vmatprep.subr.mxu0 0.0
    %v639 = vand.u32 %v87, 4294901760
    %640 = vmatpush2.msra.mxu0 %v639
    %641 = vmatprep.subr.mxu0 0.0
    %v642 = vand.u32 %v86, 4294901760
    %643 = vmatpush2.msra.mxu0 %v642
    %644 = vmatprep.subr.mxu0 0.0
    %v645 = vand.u32 %v85, 4294901760
    %646 = vmatpush2.msra.mxu0 %v645
    %647 = vmatprep.subr.mxu0 0.0
    %v648 = vand.u32 %v84, 4294901760
    %649 = vmatpush2.msra.mxu0 %v648
    %650 = vmatprep.subr.mxu0 0.0
    %v651 = vand.u32 %v83, 4294901760
    %652 = vmatpush2.msra.mxu0 %v651
    %653 = vmatprep.subr.mxu0 0.0
    %v654 = vand.u32 %v82, 4294901760
    %655 = vmatpush2.msra.mxu0 %v654
    %656 = vmatprep.subr.mxu0 0.0
    %v657 = vand.u32 %v81, 4294901760
    %658 = vmatpush2.msra.mxu0 %v657
    %659 = vmatprep.subr.mxu0 0.0
    %v660 = vand.u32 %v80, 4294901760
    %661 = vmatpush2.msra.mxu0 %v660
    %662 = vmatprep.subr.mxu0 0.0
    %v663 = vand.u32 %v79, 4294901760
    %664 = vmatpush2.msra.mxu0 %v663
    %665 = vmatprep.subr.mxu0 0.0
    %v666 = vand.u32 %v78, 4294901760
    %667 = vmatpush2.msra.mxu0 %v666
    %668 = vmatprep.subr.mxu0 0.0
    %v669 = vand.u32 %v77, 4294901760
    %670 = vmatpush2.msra.mxu0 %v669
    %v671 = vand.u32 %v60, 4294901760
    %v672 = vsub.f32 %v60, %v671
    %v673 = vand.u32 %v672, 4294901760
    %674 = vmatprep.mubr.f32.mxu0 %v673
    %v675 = vand.u32 %v58, 4294901760
    %v676 = vsub.f32 %v58, %v675
    %v677 = vand.u32 %v676, 4294901760
    %678 = vmatmul.mubr.f32.gmra.mxu0 %v677
    %v679 = vpop.f32.mrf.mxu0
    %v680 = vadd.f32 %v572, %v679
    %v681 = vpop.f32.mrf.mxu0
    %682 = vdwg.mxu0
    %683 = vmatprep.subr.mxu0 0.0
    %v684 = vand.u32 %v76, 4294901760
    %v685 = vsub.f32 %v76, %v684
    %v686 = vand.u32 %v685, 4294901760
    %687 = vmatpush1.msra.mxu0 %v686
    %688 = vmatprep.subr.mxu0 0.0
    %v689 = vand.u32 %v75, 4294901760
    %v690 = vsub.f32 %v75, %v689
    %v691 = vand.u32 %v690, 4294901760
    %692 = vmatpush1.msra.mxu0 %v691
    %693 = vmatprep.subr.mxu0 0.0
    %v694 = vand.u32 %v74, 4294901760
    %v695 = vsub.f32 %v74, %v694
    %v696 = vand.u32 %v695, 4294901760
    %697 = vmatpush1.msra.mxu0 %v696
    %698 = vmatprep.subr.mxu0 0.0
    %v699 = vand.u32 %v73, 4294901760
    %v700 = vsub.f32 %v73, %v699
    %v701 = vand.u32 %v700, 4294901760
    %702 = vmatpush1.msra.mxu0 %v701
    %703 = vmatprep.subr.mxu0 0.0
    %v704 = vand.u32 %v72, 4294901760
    %v705 = vsub.f32 %v72, %v704
    %v706 = vand.u32 %v705, 4294901760
    %707 = vmatpush1.msra.mxu0 %v706
    %708 = vmatprep.subr.mxu0 0.0
    %v709 = vand.u32 %v71, 4294901760
    %v710 = vsub.f32 %v71, %v709
    %v711 = vand.u32 %v710, 4294901760
    %712 = vmatpush1.msra.mxu0 %v711
    %713 = vmatprep.subr.mxu0 0.0
    %v714 = vand.u32 %v70, 4294901760
    %v715 = vsub.f32 %v70, %v714
    %v716 = vand.u32 %v715, 4294901760
    %717 = vmatpush1.msra.mxu0 %v716
    %718 = vmatprep.subr.mxu0 0.0
    %v719 = vand.u32 %v69, 4294901760
    %v720 = vsub.f32 %v69, %v719
    %v721 = vand.u32 %v720, 4294901760
    %722 = vmatpush1.msra.mxu0 %v721
    %723 = vmatprep.subr.mxu0 0.0
    %v724 = vand.u32 %v68, 4294901760
    %v725 = vsub.f32 %v68, %v724
    %v726 = vand.u32 %v725, 4294901760
    %727 = vmatpush1.msra.mxu0 %v726
    %728 = vmatprep.subr.mxu0 0.0
    %v729 = vand.u32 %v67, 4294901760
    %v730 = vsub.f32 %v67, %v729
    %v731 = vand.u32 %v730, 4294901760
    %732 = vmatpush1.msra.mxu0 %v731
    %733 = vmatprep.subr.mxu0 0.0
    %v734 = vand.u32 %v66, 4294901760
    %v735 = vsub.f32 %v66, %v734
    %v736 = vand.u32 %v735, 4294901760
    %737 = vmatpush1.msra.mxu0 %v736
    %738 = vmatprep.subr.mxu0 0.0
    %v739 = vand.u32 %v65, 4294901760
    %v740 = vsub.f32 %v65, %v739
    %v741 = vand.u32 %v740, 4294901760
    %742 = vmatpush1.msra.mxu0 %v741
    %743 = vmatprep.subr.mxu0 0.0
    %v744 = vand.u32 %v64, 4294901760
    %v745 = vsub.f32 %v64, %v744
    %v746 = vand.u32 %v745, 4294901760
    %747 = vmatpush1.msra.mxu0 %v746
    %748 = vmatprep.subr.mxu0 0.0
    %v749 = vand.u32 %v63, 4294901760
    %v750 = vsub.f32 %v63, %v749
    %v751 = vand.u32 %v750, 4294901760
    %752 = vmatpush1.msra.mxu0 %v751
    %753 = vmatprep.subr.mxu0 0.0
    %v754 = vand.u32 %v62, 4294901760
    %v755 = vsub.f32 %v62, %v754
    %v756 = vand.u32 %v755, 4294901760
    %757 = vmatpush1.msra.mxu0 %v756
    %758 = vmatprep.subr.mxu0 0.0
    %v759 = vand.u32 %v61, 4294901760
    %v760 = vsub.f32 %v61, %v759
    %v761 = vand.u32 %v760, 4294901760
    %762 = vmatpush1.msra.mxu0 %v761
    %763 = vmatprep.subr.mxu0 0.0
    %v764 = vand.u32 %v92, 4294901760
    %v765 = vsub.f32 %v92, %v764
    %v766 = vand.u32 %v765, 4294901760
    %767 = vmatpush2.msra.mxu0 %v766
    %768 = vmatprep.subr.mxu0 0.0
    %v769 = vand.u32 %v91, 4294901760
    %v770 = vsub.f32 %v91, %v769
    %v771 = vand.u32 %v770, 4294901760
    %772 = vmatpush2.msra.mxu0 %v771
    %773 = vmatprep.subr.mxu0 0.0
    %v774 = vand.u32 %v90, 4294901760
    %v775 = vsub.f32 %v90, %v774
    %v776 = vand.u32 %v775, 4294901760
    %777 = vmatpush2.msra.mxu0 %v776
    %778 = vmatprep.subr.mxu0 0.0
    %v779 = vand.u32 %v89, 4294901760
    %v780 = vsub.f32 %v89, %v779
    %v781 = vand.u32 %v780, 4294901760
    %782 = vmatpush2.msra.mxu0 %v781
    %783 = vmatprep.subr.mxu0 0.0
    %v784 = vand.u32 %v88, 4294901760
    %v785 = vsub.f32 %v88, %v784
    %v786 = vand.u32 %v785, 4294901760
    %787 = vmatpush2.msra.mxu0 %v786
    %788 = vmatprep.subr.mxu0 0.0
    %v789 = vand.u32 %v87, 4294901760
    %v790 = vsub.f32 %v87, %v789
    %v791 = vand.u32 %v790, 4294901760
    %792 = vmatpush2.msra.mxu0 %v791
    %793 = vmatprep.subr.mxu0 0.0
    %v794 = vand.u32 %v86, 4294901760
    %v795 = vsub.f32 %v86, %v794
    %v796 = vand.u32 %v795, 4294901760
    %797 = vmatpush2.msra.mxu0 %v796
    %798 = vmatprep.subr.mxu0 0.0
    %v799 = vand.u32 %v85, 4294901760
    %v800 = vsub.f32 %v85, %v799
    %v801 = vand.u32 %v800, 4294901760
    %802 = vmatpush2.msra.mxu0 %v801
    %803 = vmatprep.subr.mxu0 0.0
    %v804 = vand.u32 %v84, 4294901760
    %v805 = vsub.f32 %v84, %v804
    %v806 = vand.u32 %v805, 4294901760
    %807 = vmatpush2.msra.mxu0 %v806
    %808 = vmatprep.subr.mxu0 0.0
    %v809 = vand.u32 %v83, 4294901760
    %v810 = vsub.f32 %v83, %v809
    %v811 = vand.u32 %v810, 4294901760
    %812 = vmatpush2.msra.mxu0 %v811
    %813 = vmatprep.subr.mxu0 0.0
    %v814 = vand.u32 %v82, 4294901760
    %v815 = vsub.f32 %v82, %v814
    %v816 = vand.u32 %v815, 4294901760
    %817 = vmatpush2.msra.mxu0 %v816
    %818 = vmatprep.subr.mxu0 0.0
    %v819 = vand.u32 %v81, 4294901760
    %v820 = vsub.f32 %v81, %v819
    %v821 = vand.u32 %v820, 4294901760
    %822 = vmatpush2.msra.mxu0 %v821
    %823 = vmatprep.subr.mxu0 0.0
    %v824 = vand.u32 %v80, 4294901760
    %v825 = vsub.f32 %v80, %v824
    %v826 = vand.u32 %v825, 4294901760
    %827 = vmatpush2.msra.mxu0 %v826
    %828 = vmatprep.subr.mxu0 0.0
    %v829 = vand.u32 %v79, 4294901760
    %v830 = vsub.f32 %v79, %v829
    %v831 = vand.u32 %v830, 4294901760
    %832 = vmatpush2.msra.mxu0 %v831
    %833 = vmatprep.subr.mxu0 0.0
    %v834 = vand.u32 %v78, 4294901760
    %v835 = vsub.f32 %v78, %v834
    %v836 = vand.u32 %v835, 4294901760
    %837 = vmatpush2.msra.mxu0 %v836
    %838 = vmatprep.subr.mxu0 0.0
    %v839 = vand.u32 %v77, 4294901760
    %v840 = vsub.f32 %v77, %v839
    %v841 = vand.u32 %v840, 4294901760
    %842 = vmatpush2.msra.mxu0 %v841
    %v843 = vand.u32 %v60, 4294901760
    %844 = vmatprep.mubr.f32.mxu0 %v843
    %v845 = vand.u32 %v58, 4294901760
    %846 = vmatmul.mubr.f32.gmra.mxu0 %v845
    %v847 = vpop.f32.mrf.mxu0
    %v848 = vadd.f32 %v680, %v847
    %v849 = vpop.f32.mrf.mxu0
    %850 = vdwg.mxu0
    %851 = vmatprep.subr.mxu0 0.0
    %v852 = vand.u32 %v76, 4294901760
    %853 = vmatpush1.msra.mxu0 %v852
    %854 = vmatprep.subr.mxu0 0.0
    %v855 = vand.u32 %v75, 4294901760
    %856 = vmatpush1.msra.mxu0 %v855
    %857 = vmatprep.subr.mxu0 0.0
    %v858 = vand.u32 %v74, 4294901760
    %859 = vmatpush1.msra.mxu0 %v858
    %860 = vmatprep.subr.mxu0 0.0
    %v861 = vand.u32 %v73, 4294901760
    %862 = vmatpush1.msra.mxu0 %v861
    %863 = vmatprep.subr.mxu0 0.0
    %v864 = vand.u32 %v72, 4294901760
    %865 = vmatpush1.msra.mxu0 %v864
    %866 = vmatprep.subr.mxu0 0.0
    %v867 = vand.u32 %v71, 4294901760
    %868 = vmatpush1.msra.mxu0 %v867
    %869 = vmatprep.subr.mxu0 0.0
    %v870 = vand.u32 %v70, 4294901760
    %871 = vmatpush1.msra.mxu0 %v870
    %872 = vmatprep.subr.mxu0 0.0
    %v873 = vand.u32 %v69, 4294901760
    %874 = vmatpush1.msra.mxu0 %v873
    %875 = vmatprep.subr.mxu0 0.0
    %v876 = vand.u32 %v68, 4294901760
    %877 = vmatpush1.msra.mxu0 %v876
    %878 = vmatprep.subr.mxu0 0.0
    %v879 = vand.u32 %v67, 4294901760
    %880 = vmatpush1.msra.mxu0 %v879
    %881 = vmatprep.subr.mxu0 0.0
    %v882 = vand.u32 %v66, 4294901760
    %883 = vmatpush1.msra.mxu0 %v882
    %884 = vmatprep.subr.mxu0 0.0
    %v885 = vand.u32 %v65, 4294901760
    %886 = vmatpush1.msra.mxu0 %v885
    %887 = vmatprep.subr.mxu0 0.0
    %v888 = vand.u32 %v64, 4294901760
    %889 = vmatpush1.msra.mxu0 %v888
    %890 = vmatprep.subr.mxu0 0.0
    %v891 = vand.u32 %v63, 4294901760
    %892 = vmatpush1.msra.mxu0 %v891
    %893 = vmatprep.subr.mxu0 0.0
    %v894 = vand.u32 %v62, 4294901760
    %895 = vmatpush1.msra.mxu0 %v894
    %896 = vmatprep.subr.mxu0 0.0
    %v897 = vand.u32 %v61, 4294901760
    %898 = vmatpush1.msra.mxu0 %v897
    %899 = vmatprep.subr.mxu0 0.0
    %v900 = vand.u32 %v92, 4294901760
    %901 = vmatpush2.msra.mxu0 %v900
    %902 = vmatprep.subr.mxu0 0.0
    %v903 = vand.u32 %v91, 4294901760
    %904 = vmatpush2.msra.mxu0 %v903
    %905 = vmatprep.subr.mxu0 0.0
    %v906 = vand.u32 %v90, 4294901760
    %907 = vmatpush2.msra.mxu0 %v906
    %908 = vmatprep.subr.mxu0 0.0
    %v909 = vand.u32 %v89, 4294901760
    %910 = vmatpush2.msra.mxu0 %v909
    %911 = vmatprep.subr.mxu0 0.0
    %v912 = vand.u32 %v88, 4294901760
    %913 = vmatpush2.msra.mxu0 %v912
    %914 = vmatprep.subr.mxu0 0.0
    %v915 = vand.u32 %v87, 4294901760
    %916 = vmatpush2.msra.mxu0 %v915
    %917 = vmatprep.subr.mxu0 0.0
    %v918 = vand.u32 %v86, 4294901760
    %919 = vmatpush2.msra.mxu0 %v918
    %920 = vmatprep.subr.mxu0 0.0
    %v921 = vand.u32 %v85, 4294901760
    %922 = vmatpush2.msra.mxu0 %v921
    %923 = vmatprep.subr.mxu0 0.0
    %v924 = vand.u32 %v84, 4294901760
    %925 = vmatpush2.msra.mxu0 %v924
    %926 = vmatprep.subr.mxu0 0.0
    %v927 = vand.u32 %v83, 4294901760
    %928 = vmatpush2.msra.mxu0 %v927
    %929 = vmatprep.subr.mxu0 0.0
    %v930 = vand.u32 %v82, 4294901760
    %931 = vmatpush2.msra.mxu0 %v930
    %932 = vmatprep.subr.mxu0 0.0
    %v933 = vand.u32 %v81, 4294901760
    %934 = vmatpush2.msra.mxu0 %v933
    %935 = vmatprep.subr.mxu0 0.0
    %v936 = vand.u32 %v80, 4294901760
    %937 = vmatpush2.msra.mxu0 %v936
    %938 = vmatprep.subr.mxu0 0.0
    %v939 = vand.u32 %v79, 4294901760
    %940 = vmatpush2.msra.mxu0 %v939
    %941 = vmatprep.subr.mxu0 0.0
    %v942 = vand.u32 %v78, 4294901760
    %943 = vmatpush2.msra.mxu0 %v942
    %944 = vmatprep.subr.mxu0 0.0
    %v945 = vand.u32 %v77, 4294901760
    %946 = vmatpush2.msra.mxu0 %v945
    %v947 = vand.u32 %v60, 4294901760
    %948 = vmatprep.mubr.f32.mxu0 %v947
    %v949 = vand.u32 %v58, 4294901760
    %950 = vmatmul.mubr.f32.gmra.mxu0 %v949
    %v951 = vpop.f32.mrf.mxu0
    %v952 = vadd.f32 %v848, %v951
    %v953 = vpop.f32.mrf.mxu0
    %954 = vdwg.mxu0
    %v955 = vmax.f32 %v952, 1e-37
    %v956 = vlog2.pop %v955
    %v957 = vmul.f32 %v956, 0.6931472
    %v958 = vstv %s45
    %v959 = vmul.f32 %v957, %v958
    %v960 = vmul.f32 %v959, 1.442695
    %v961 = vpow.pop %v960
    %962 = vst [vmem:[#allocation8] sm:$0xff] %v961
    // Predicated region
    $region22: #{tpu_custom_call.1} parent=1 // pred_check
      _
    $region23: #{tpu_custom_call.1} parent=1 // pred_check_branch
      %964 = sbr.rel (0) target = $region25
    $region24: #{tpu_custom_call.1} parent=1 // pred_region
      %s966 = ssub.s32 128, 128
      %967 = vsyncadd [#allocation5], %s966
      %s969 = sshll.u32 [#allocation8], 4
      %s970 = int_to_ptr.vmem [resolvable:$true] %s969
      %972 = dma.vmem_to_hbm [thread:$0]  %s970, 128, %s3, [#allocation5]
    $region25: #{tpu_custom_call.1} parent=1 // pred_fallthru
      _
    // Predicated region
    $region26: #{tpu_custom_call.1} parent=1 // pred_check
      _
    $region27: #{tpu_custom_call.1} parent=1 // pred_check_branch
      %974 = sbr.rel (0) target = $region29
    $region28: #{tpu_custom_call.1} parent=1 // pred_region
      %975 = dma.done [#allocation5], 128
    $region29: #{tpu_custom_call.1} parent=1 // pred_fallthru
      _
    %976 = vsyncpa [#allocation4], 1
    %977 = vsyncpa [#allocation7], 1
    %978 = vsyncpa [#allocation5], 1

</llo_original>
